<compile_context>
chip_gen: v5e
topology: v5e:2x2
jax: 0.10.0
libtpu: 0.0.40
codegen_flags: <defaults>
</compile_context>

<pallas_src>
import functools

import jax
import jax.numpy as jnp
from jax.experimental import pallas as pl
from jax.experimental.pallas import tpu as pltpu


def _round_up(x, m):
    return ((x + m - 1) // m) * m


def _cdiv(a, b):
    return (a + b - 1) // b


def policy_kernel(x_ref, w1_ref, b1_ref, w2_ref, b2_ref, w3_ref, b3_ref,
                  probs_ref, *, action_size):
    x = x_ref[...]                                            # (TB, S)

    # ---- linear1 + ReLU ----
    h1 = jnp.dot(x, w1_ref[...], preferred_element_type=jnp.float32)
    h1 = jnp.maximum(h1 + b1_ref[...], 0.0)                   # (TB, H)

    # ---- linear2 + ReLU ----
    h2 = jnp.dot(h1, w2_ref[...], preferred_element_type=jnp.float32)
    h2 = jnp.maximum(h2 + b2_ref[...], 0.0)                   # (TB, 2H)

    # ---- linear3 (lane-dense padded N for the MXU) ----
    logits = jnp.dot(h2, w3_ref[...], preferred_element_type=jnp.float32)
    logits = logits + b3_ref[...]                             # (TB, A_pad)

    # ---- numerically stable softmax along last dim ----
    # Padded columns have zero weights and bias -1e30 -> exp(...) == 0
    # exactly, so they do not perturb max/sum.
    m = jnp.max(logits, axis=-1, keepdims=True)
    e = jnp.exp(logits - m)
    denom = jnp.sum(e, axis=-1, keepdims=True)
    probs = e / denom            # exact divide (approx vrcp broke 1e-5 tol)

    # Store only the real action columns: HBM output is (B, A), not the
    # 128-padded intermediate.
    probs_ref[...] = probs[:, :action_size].astype(probs_ref.dtype)


@functools.partial(jax.jit, static_argnames=("max_tile_b",))
def policy_forward(state, params, max_tile_b=2048):
    """state: (B, state_size) f32. Returns categorical probs (B, action_size)."""
    w1, b1, w2, b2, w3, b3 = params
    B, S = state.shape
    H = w1.shape[1]
    H2 = w2.shape[1]
    A = w3.shape[1]

    # Lane-dense N for the last matmul: pad to a multiple of 128. Padded
    # weight columns are 0; padded bias entries are -1e30 so the padded
    # logits vanish under exp(). Only intermediates use this padding.
    A_pad = max(128, _round_up(A, 128))
    w3p = jnp.pad(w3, ((0, 0), (0, A_pad - A)))
    b3p = jnp.pad(b3, ((0, 0), (0, A_pad - A)), constant_values=-1e30)

    # Batch tiling: sublane-aligned (multiple of 8) tiles, ragged last block
    # (no pad-to-tile waste). Big tiles amortize per-grid-step overhead.
    tile_b = min(max_tile_b, _round_up(B, 8))
    # v7x: keep >= 2 grid steps when the batch allows so the "parallel" axis
    # shards across both TensorCores. Costs one cheap extra step on v5e/v6e.
    if B >= 16 and _cdiv(B, tile_b) < 2:
        tile_b = _round_up(_cdiv(B, 2), 8)
    grid = (_cdiv(B, tile_b),)

    const = lambda i: (0, 0)           # weights/biases resident across steps
    cost = pl.CostEstimate(
        flops=2 * B * (S * H + H * H2 + H2 * A_pad),
        transcendentals=B * A_pad,
        bytes_accessed=4 * (B * S + S * H + H + H * H2 + H2
                            + H2 * A_pad + A_pad + B * A),
    )

    kernel = functools.partial(policy_kernel, action_size=A)

    return pl.pallas_call(
        kernel,
        out_shape=jax.ShapeDtypeStruct((B, A), jnp.float32),
        grid_spec=pltpu.PrefetchScalarGridSpec(
            num_scalar_prefetch=0,
            grid=grid,
            in_specs=[
                pl.BlockSpec((tile_b, S), lambda i: (i, 0)),   # state tile
                pl.BlockSpec((S, H), const),                   # w1
                pl.BlockSpec((1, H), const),                   # b1
                pl.BlockSpec((H, H2), const),                  # w2
                pl.BlockSpec((1, H2), const),                  # b2
                pl.BlockSpec((H2, A_pad), const),              # w3 (padded)
                pl.BlockSpec((1, A_pad), const),               # b3 (padded)
            ],
            out_specs=pl.BlockSpec((tile_b, A), lambda i: (i, 0)),
        ),
        compiler_params=pltpu.CompilerParams(
            dimension_semantics=("parallel",)),
        cost_estimate=cost,
    )(state, w1, b1, w2, b2, w3p, b3p)


def init_params(key, state_size, action_size, hidden_size):
    """Deterministic init mimicking nn.Linear's U(-1/sqrt(fan_in), 1/sqrt(fan_in)).

    Weights are stored as (in_features, out_features) — i.e. PyTorch W^T —
    so the kernel computes x @ W + b.
    """
    def linear(k, fan_in, fan_out):
        kw, kb = jax.random.split(k)
        bound = 1.0 / (fan_in ** 0.5)
        w = jax.random.uniform(kw, (fan_in, fan_out), jnp.float32,
                               minval=-bound, maxval=bound)
        b = jax.random.uniform(kb, (1, fan_out), jnp.float32,
                               minval=-bound, maxval=bound)
        return w, b

    k1, k2, k3 = jax.random.split(key, 3)
    w1, b1 = linear(k1, state_size, hidden_size)
    w2, b2 = linear(k2, hidden_size, 2 * hidden_size)
    w3, b3 = linear(k3, 2 * hidden_size, action_size)
    return (w1, b1, w2, b2, w3, b3)


def _reference_forward(state, params):
    """Plain-JAX reference for correctness check."""
    w1, b1, w2, b2, w3, b3 = params
    h1 = jax.nn.relu(state @ w1 + b1)
    h2 = jax.nn.relu(h1 @ w2 + b2)
    logits = h2 @ w3 + b3
    return jax.nn.softmax(logits, axis=-1)


if __name__ == "__main__":
    state_size = 4      # e.g. CartPole observation dim
    action_size = 6
    hidden_size = 32
    batch = 8

    key = jax.random.PRNGKey(0)
    k_params, k_state = jax.random.split(key)
    params = init_params(k_params, state_size, action_size, hidden_size)
    state = jax.random.normal(k_state, (batch, state_size), jnp.float32)

    probs = jax.block_until_ready(policy_forward(state, params))
    ref = _reference_forward(state, params)
    assert probs.shape == (batch, action_size)
    assert jnp.allclose(probs, ref, atol=1e-5, rtol=1e-5)
    # probabilities sum to 1 along the action axis
    assert jnp.allclose(jnp.sum(probs, axis=-1), 1.0, atol=1e-5)

    # Also exercise a larger, non-tile-aligned batch to cover the ragged
    # last-block / multi-step grid path (and v7x dual-TC sharding).
    big_state = jax.random.normal(jax.random.PRNGKey(1), (1030, state_size),
                                  jnp.float32)
    big_probs = jax.block_until_ready(policy_forward(big_state, params))
    big_ref = _reference_forward(big_state, params)
    assert big_probs.shape == (1030, action_size)
    assert jnp.allclose(big_probs, big_ref, atol=1e-5, rtol=1e-5)

    print("KERNEL_OK")
</pallas_src>

<mosaic_0001>
module attributes {stable_mosaic.version = 11 : i64} {
  func.func @policy_kernel(%arg0: i32, %arg1: memref<8x4xf32, #tpu.memory_space<vmem>>, %arg2: memref<4x32xf32, #tpu.memory_space<vmem>>, %arg3: memref<1x32xf32, #tpu.memory_space<vmem>>, %arg4: memref<32x64xf32, #tpu.memory_space<vmem>>, %arg5: memref<1x64xf32, #tpu.memory_space<vmem>>, %arg6: memref<64x128xf32, #tpu.memory_space<vmem>>, %arg7: memref<1x128xf32, #tpu.memory_space<vmem>>, %arg8: memref<8x6xf32, #tpu.memory_space<vmem>>) attributes {dimension_semantics = [#tpu.dimension_semantics<parallel>], iteration_bounds = array<i64: 1>, scalar_prefetch = 0 : i64, scratch_operands = 0 : i64, tpu.core_type = #tpu.core_type<tc>, window_params = [{transform_indices = @transform_0, window_bounds = array<i64: 8, 4>}, {pipeline_mode = #tpu.pipeline_mode<synchronous>, transform_indices = @transform_1, window_bounds = array<i64: 4, 32>}, {pipeline_mode = #tpu.pipeline_mode<synchronous>, transform_indices = @transform_2, window_bounds = array<i64: 1, 32>}, {pipeline_mode = #tpu.pipeline_mode<synchronous>, transform_indices = @transform_3, window_bounds = array<i64: 32, 64>}, {pipeline_mode = #tpu.pipeline_mode<synchronous>, transform_indices = @transform_4, window_bounds = array<i64: 1, 64>}, {pipeline_mode = #tpu.pipeline_mode<synchronous>, transform_indices = @transform_5, window_bounds = array<i64: 64, 128>}, {pipeline_mode = #tpu.pipeline_mode<synchronous>, transform_indices = @transform_6, window_bounds = array<i64: 1, 128>}, {transform_indices = @transform_7, window_bounds = array<i64: 8, 6>}]} {
    %c0 = arith.constant 0 : index
    %c0_0 = arith.constant 0 : index
    %0 = vector.load %arg1[%c0, %c0_0] : memref<8x4xf32, #tpu.memory_space<vmem>>, vector<8x4xf32>
    %c0_1 = arith.constant 0 : index
    %c0_2 = arith.constant 0 : index
    %1 = vector.load %arg2[%c0_1, %c0_2] : memref<4x32xf32, #tpu.memory_space<vmem>>, vector<4x32xf32>
    %cst = arith.constant dense<0.000000e+00> : vector<8x32xf32>
    %2 = tpu.matmul %0, %1, %cst {dimension_numbers = #tpu.dot_dimension_numbers<[1], [0], [0], [1], [0, 0, 1, 1], [], []>} : vector<8x4xf32>, vector<4x32xf32>, vector<8x32xf32> -> vector<8x32xf32>
    %c0_3 = arith.constant 0 : index
    %c0_4 = arith.constant 0 : index
    %3 = vector.load %arg3[%c0_3, %c0_4] : memref<1x32xf32, #tpu.memory_space<vmem>>, vector<1x32xf32>
    %4 = vector.broadcast %3 : vector<1x32xf32> to vector<8x32xf32>
    %5 = arith.addf %2, %4 : vector<8x32xf32>
    %cst_5 = arith.constant 0.000000e+00 : f32
    %6 = vector.broadcast %cst_5 : f32 to vector<8x32xf32>
    %7 = arith.maximumf %5, %6 : vector<8x32xf32>
    %c0_6 = arith.constant 0 : index
    %c0_7 = arith.constant 0 : index
    %8 = vector.load %arg4[%c0_6, %c0_7] : memref<32x64xf32, #tpu.memory_space<vmem>>, vector<32x64xf32>
    %cst_8 = arith.constant dense<0.000000e+00> : vector<8x64xf32>
    %9 = tpu.matmul %7, %8, %cst_8 {dimension_numbers = #tpu.dot_dimension_numbers<[1], [0], [0], [1], [0, 0, 1, 1], [], []>} : vector<8x32xf32>, vector<32x64xf32>, vector<8x64xf32> -> vector<8x64xf32>
    %c0_9 = arith.constant 0 : index
    %c0_10 = arith.constant 0 : index
    %10 = vector.load %arg5[%c0_9, %c0_10] : memref<1x64xf32, #tpu.memory_space<vmem>>, vector<1x64xf32>
    %11 = vector.broadcast %10 : vector<1x64xf32> to vector<8x64xf32>
    %12 = arith.addf %9, %11 : vector<8x64xf32>
    %cst_11 = arith.constant 0.000000e+00 : f32
    %13 = vector.broadcast %cst_11 : f32 to vector<8x64xf32>
    %14 = arith.maximumf %12, %13 : vector<8x64xf32>
    %c0_12 = arith.constant 0 : index
    %c0_13 = arith.constant 0 : index
    %15 = vector.load %arg6[%c0_12, %c0_13] : memref<64x128xf32, #tpu.memory_space<vmem>>, vector<64x128xf32>
    %cst_14 = arith.constant dense<0.000000e+00> : vector<8x128xf32>
    %16 = tpu.matmul %14, %15, %cst_14 {dimension_numbers = #tpu.dot_dimension_numbers<[1], [0], [0], [1], [0, 0, 1, 1], [], []>} : vector<8x64xf32>, vector<64x128xf32>, vector<8x128xf32> -> vector<8x128xf32>
    %c0_15 = arith.constant 0 : index
    %c0_16 = arith.constant 0 : index
    %17 = vector.load %arg7[%c0_15, %c0_16] : memref<1x128xf32, #tpu.memory_space<vmem>>, vector<1x128xf32>
    %18 = vector.broadcast %17 : vector<1x128xf32> to vector<8x128xf32>
    %19 = arith.addf %16, %18 : vector<8x128xf32>
    %cst_17 = arith.constant dense<0xFF800000> : vector<8xf32>
    %20 = vector.multi_reduction <maximumf>, %19, %cst_17 [1] : vector<8x128xf32> to vector<8xf32>
    %21 = vector.shape_cast %20 : vector<8xf32> to vector<8x1xf32>
    %22 = vector.broadcast %21 : vector<8x1xf32> to vector<8x128xf32>
    %23 = arith.subf %19, %22 : vector<8x128xf32>
    %24 = math.exp %23 : vector<8x128xf32>
    %cst_18 = arith.constant dense<0.000000e+00> : vector<8xf32>
    %25 = vector.multi_reduction <add>, %24, %cst_18 [1] : vector<8x128xf32> to vector<8xf32>
    %26 = vector.shape_cast %25 : vector<8xf32> to vector<8x1xf32>
    %27 = vector.broadcast %26 : vector<8x1xf32> to vector<8x128xf32>
    %28 = arith.divf %24, %27 : vector<8x128xf32>
    %29 = vector.extract_strided_slice %28 {offsets = [0, 0], sizes = [8, 6], strides = [1, 1]} : vector<8x128xf32> to vector<8x6xf32>
    %c0_19 = arith.constant 0 : index
    %c0_20 = arith.constant 0 : index
    %30 = vector.load %arg8[%c0_19, %c0_20] : memref<8x6xf32, #tpu.memory_space<vmem>>, vector<8x6xf32>
    tpu.vector_store %arg8[%c0_19, %c0_20], %29 {strides = array<i32>} : memref<8x6xf32, #tpu.memory_space<vmem>>, vector<8x6xf32>,
    return
  }
  func.func @transform_0(%arg0: i32) -> (i32, i32) {
    %c0_i32 = arith.constant 0 : i32
    %c0_i32_0 = arith.constant 0 : i32
    return %arg0, %c0_i32 : i32, i32
  }
  func.func @transform_1(%arg0: i32) -> (i32, i32) {
    %c0_i32 = arith.constant 0 : i32
    %c0_i32_0 = arith.constant 0 : i32
    %c0_i32_1 = arith.constant 0 : i32
    return %c0_i32, %c0_i32_0 : i32, i32
  }
  func.func @transform_2(%arg0: i32) -> (i32, i32) {
    %c0_i32 = arith.constant 0 : i32
    %c0_i32_0 = arith.constant 0 : i32
    %c0_i32_1 = arith.constant 0 : i32
    return %c0_i32, %c0_i32_0 : i32, i32
  }
  func.func @transform_3(%arg0: i32) -> (i32, i32) {
    %c0_i32 = arith.constant 0 : i32
    %c0_i32_0 = arith.constant 0 : i32
    %c0_i32_1 = arith.constant 0 : i32
    return %c0_i32, %c0_i32_0 : i32, i32
  }
  func.func @transform_4(%arg0: i32) -> (i32, i32) {
    %c0_i32 = arith.constant 0 : i32
    %c0_i32_0 = arith.constant 0 : i32
    %c0_i32_1 = arith.constant 0 : i32
    return %c0_i32, %c0_i32_0 : i32, i32
  }
  func.func @transform_5(%arg0: i32) -> (i32, i32) {
    %c0_i32 = arith.constant 0 : i32
    %c0_i32_0 = arith.constant 0 : i32
    %c0_i32_1 = arith.constant 0 : i32
    return %c0_i32, %c0_i32_0 : i32, i32
  }
  func.func @transform_6(%arg0: i32) -> (i32, i32) {
    %c0_i32 = arith.constant 0 : i32
    %c0_i32_0 = arith.constant 0 : i32
    %c0_i32_1 = arith.constant 0 : i32
    return %c0_i32, %c0_i32_0 : i32, i32
  }
  func.func @transform_7(%arg0: i32) -> (i32, i32) {
    %c0_i32 = arith.constant 0 : i32
    %c0_i32_0 = arith.constant 0 : i32
    return %arg0, %c0_i32 : i32, i32
  }
}

</mosaic_0001>

<llo_original>
// kernel: policy_forward.1
$region0: #{policy_forward.1}
  #allocation0 [shape = 'u32[]', space=smem, size = 0x4, offset = 0x4, fixed_abs, tag = 'smem constant byte address 0x4 - core index']
  #allocation1 [shape = 'u32[72,128]{1,0:T(1,128)}', space=vmem, size = 0x9000, scoped, tag = 'internal scratch']
  %s0 = inlined_call_operand.vmem [shape: f32[8,4], index: 0, kind: input, shape index: {}]
  %s1 = inlined_call_operand.vmem [shape: f32[4,32], index: 1, kind: input, shape index: {}]
  %s2 = inlined_call_operand.vmem [shape: f32[1,32], index: 2, kind: input, shape index: {}]
  %s3 = inlined_call_operand.vmem [shape: f32[32,64], index: 3, kind: input, shape index: {}]
  %s4 = inlined_call_operand.vmem [shape: f32[1,64], index: 4, kind: input, shape index: {}]
  %s5 = inlined_call_operand.vmem [shape: f32[64,128], index: 5, kind: input, shape index: {}]
  %s6 = inlined_call_operand.vmem [shape: f32[1,128], index: 6, kind: input, shape index: {}]
  %s7 = inlined_call_operand.hbm [shape: f32[8,6], index: 7, kind: output, shape index: {}]
  %s8 = sld [smem:[#allocation0]]
  $region38: #{policy_forward.1} parent=0
    _
  %s10 = ssub.s32 1, %s8
  %s11 = scalar_select 0, %s10, %s8
  $region1: #{policy_forward.1} parent=0
    #allocation2 [shape = 'u8[4096]{0}', space=vmem, size = 0x1000, scoped, tag = 'output window, operand 0, single buffered']
    #allocation3 [shape = 's32[1]{0}', space=sflag, size = 0x4, scoped, tag = 'scoped memory for policy_forward.1']
    %12 = vsyncpa [#allocation3], 0
    // Predicated region
    $region2: #{policy_forward.1} parent=1 // pred_check
      _
    $region3: #{policy_forward.1} parent=1 // pred_check_branch
      %14 = sbr.rel (0) target = $region5
    $region4: #{policy_forward.1} parent=1 // pred_region
      _
    $region5: #{policy_forward.1} parent=1 // pred_fallthru
      _
    // Predicated region
    $region6: #{policy_forward.1} parent=1 // pred_check
      _
    $region7: #{policy_forward.1} parent=1 // pred_check_branch
      %16 = sbr.rel (0) target = $region9
    $region8: #{policy_forward.1} parent=1 // pred_region
      _
    $region9: #{policy_forward.1} parent=1 // pred_fallthru
      _
    // Predicated region
    $region10: #{policy_forward.1} parent=1 // pred_check
      _
    $region11: #{policy_forward.1} parent=1 // pred_check_branch
      %18 = sbr.rel (0) target = $region13
    $region12: #{policy_forward.1} parent=1 // pred_region
      _
    $region13: #{policy_forward.1} parent=1 // pred_fallthru
      _
    // Predicated region
    $region14: #{policy_forward.1} parent=1 // pred_check
      _
    $region15: #{policy_forward.1} parent=1 // pred_check_branch
      %20 = sbr.rel (0) target = $region17
    $region16: #{policy_forward.1} parent=1 // pred_region
      _
    $region17: #{policy_forward.1} parent=1 // pred_fallthru
      _
    // Predicated region
    $region18: #{policy_forward.1} parent=1 // pred_check
      _
    $region19: #{policy_forward.1} parent=1 // pred_check_branch
      %22 = sbr.rel (0) target = $region21
    $region20: #{policy_forward.1} parent=1 // pred_region
      _
    $region21: #{policy_forward.1} parent=1 // pred_fallthru
      _
    // Predicated region
    $region22: #{policy_forward.1} parent=1 // pred_check
      _
    $region23: #{policy_forward.1} parent=1 // pred_check_branch
      %24 = sbr.rel (0) target = $region25
    $region24: #{policy_forward.1} parent=1 // pred_region
      _
    $region25: #{policy_forward.1} parent=1 // pred_fallthru
      _
    // Predicated region
    $region26: #{policy_forward.1} parent=1 // pred_check
      _
    $region27: #{policy_forward.1} parent=1 // pred_check_branch
      %26 = sbr.rel (0) target = $region29
    $region28: #{policy_forward.1} parent=1 // pred_region
      _
    $region29: #{policy_forward.1} parent=1 // pred_fallthru
      _
    %v27 = vld [vmem:[%s0] sm:$0xff]
    %v28 = vld [vmem:[%s1] sm:$0xf]
    %v29 = vld [vmem:[%s2] sm:$0x1]
    %v31 = vperm.slane %v29, 0
    %vm33 = vcmask 31744
    %v35 = vsel %vm33, %v27, 0
    %vm37 = vcmask 1043456
    %v39 = vsel %vm37, %v28, 0
    %41 = vmatpush.msra.mxu0 0.0
    %42 = vmatpush.msra.mxu0 0.0
    %43 = vmatpush.msra.mxu0 0.0
    %44 = vmatpush.msra.mxu0 0.0
    %45 = vmatpush.msra.mxu0 0.0
    %46 = vmatpush.msra.mxu0 0.0
    %47 = vmatpush.msra.mxu0 0.0
    %48 = vmatpush.msra.mxu0 0.0
    %49 = vmatpush.msra.mxu0 0.0
    %50 = vmatpush.msra.mxu0 0.0
    %51 = vmatpush.msra.mxu0 0.0
    %52 = vmatpush.msra.mxu0 0.0
    %53 = vmatpush.msra.mxu0 0.0
    %54 = vmatpush.msra.mxu0 0.0
    %55 = vmatpush.msra.mxu0 0.0
    %56 = vmatpush.msra.mxu0 %v39
    %57 = vmatmul.f32.gmra.mxu0 %v35
    %v58 = vpop.f32.mrf.mxu0
    %v59 = vadd.f32 %v31, %v58
    %60 = vdwg.mxu0
    %v61 = vmax.f32 %v59, 0.0
    %v62 = vld [vmem:[%s3] sm:$0xff]
    %v63 = vld [vmem:[%s3 + $0x8] sm:$0xff]
    %v64 = vld [vmem:[%s3 + $0x10] sm:$0xff]
    %v65 = vld [vmem:[%s3 + $0x18] sm:$0xff]
    %v66 = vld [vmem:[%s4] sm:$0x1]
    %v68 = vperm.slane %v66, 0
    %vm70 = vcmask 261120
    %v72 = vsel %vm70, %v61, 0
    %74 = vmatpush.msra.mxu0 0.0
    %75 = vmatpush.msra.mxu0 0.0
    %76 = vmatpush.msra.mxu0 0.0
    %77 = vmatpush.msra.mxu0 0.0
    %78 = vmatpush.msra.mxu0 0.0
    %79 = vmatpush.msra.mxu0 0.0
    %80 = vmatpush.msra.mxu0 0.0
    %81 = vmatpush.msra.mxu0 0.0
    %82 = vmatpush.msra.mxu0 0.0
    %83 = vmatpush.msra.mxu0 0.0
    %84 = vmatpush.msra.mxu0 0.0
    %85 = vmatpush.msra.mxu0 0.0
    %86 = vmatpush.msra.mxu0 %v65
    %87 = vmatpush.msra.mxu0 %v64
    %88 = vmatpush.msra.mxu0 %v63
    %89 = vmatpush.msra.mxu0 %v62
    %90 = vmatmul.f32.gmra.mxu0 %v72
    %v91 = vpop.f32.mrf.mxu0
    %v92 = vadd.f32 %v68, %v91
    %93 = vdwg.mxu0
    %v94 = vmax.f32 %v92, 0.0
    %v95 = vld [vmem:[%s5] sm:$0xff]
    %v96 = vld [vmem:[%s5 + $0x8] sm:$0xff]
    %v97 = vld [vmem:[%s5 + $0x10] sm:$0xff]
    %v98 = vld [vmem:[%s5 + $0x18] sm:$0xff]
    %v99 = vld [vmem:[%s5 + $0x20] sm:$0xff]
    %v100 = vld [vmem:[%s5 + $0x28] sm:$0xff]
    %v101 = vld [vmem:[%s5 + $0x30] sm:$0xff]
    %v102 = vld [vmem:[%s5 + $0x38] sm:$0xff]
    %v103 = vld [vmem:[%s6] sm:$0x1]
    %v105 = vperm.slane %v103, 0
    %vm107 = vcmask 523264
    %v109 = vsel %vm107, %v94, 0
    %111 = vmatpush.msra.mxu0 0.0
    %112 = vmatpush.msra.mxu0 0.0
    %113 = vmatpush.msra.mxu0 0.0
    %114 = vmatpush.msra.mxu0 0.0
    %115 = vmatpush.msra.mxu0 0.0
    %116 = vmatpush.msra.mxu0 0.0
    %117 = vmatpush.msra.mxu0 0.0
    %118 = vmatpush.msra.mxu0 0.0
    %119 = vmatpush.msra.mxu0 %v102
    %120 = vmatpush.msra.mxu0 %v101
    %121 = vmatpush.msra.mxu0 %v100
    %122 = vmatpush.msra.mxu0 %v99
    %123 = vmatpush.msra.mxu0 %v98
    %124 = vmatpush.msra.mxu0 %v97
    %125 = vmatpush.msra.mxu0 %v96
    %126 = vmatpush.msra.mxu0 %v95
    %127 = vmatmul.f32.gmra.mxu0 %v109
    %v128 = vpop.f32.mrf.mxu0
    %v129 = vadd.f32 %v105, %v128
    %130 = vdwg.mxu0
    %131 = vmax.xlane.f32.xlu0 %v129
    %v132 = vpop.xlane.xlu0 %131
    %v133 = vsub.f32 %v129, %v132
    %v134 = vmul.f32 %v133, 1.442695
    %v135 = vpow.pop %v134
    %136 = vadd.xlane.f32.xlu0 %v135
    %v137 = vpop.xlane.xlu0 %136
    %v138 = vrcp.pop %v137
    %v139 = vmul.f32 %v137, %v138
    %v140 = vsub.f32 1.0, %v139
    %v141 = vmul.f32 %v138, %v140
    %v142 = vadd.f32 %v138, %v141
    %vm143 = vweird.f32 %v137
    %vm144 = vweird.f32 %v138
    %vm145 = vmor %vm143, %vm144
    %v146 = vsel %vm145, %v138, %v142
    %v147 = vand.u32 2147483647, %v137
    %vm148 = vcmp.eq.f32.partialorder %v147, 8.507059e+37
    %v149 = vand.u32 %v137, 2147483648
    %v150 = vor.u32 1.1754944e-38, %v149
    %v151 = vsel %vm148, %v150, %v146
    %v152 = vmul.f32 %v135, %v151
    %vm153 = vcmask 48128
    %154 = vst.msk [vmem:[#allocation2] sm:$0xff] %vm153, %v152
    // Predicated region
    $region30: #{policy_forward.1} parent=1 // pred_check
      _
    $region31: #{policy_forward.1} parent=1 // pred_check_branch
      %156 = sbr.rel (0) target = $region33
    $region32: #{policy_forward.1} parent=1 // pred_region
      %158 = vsyncadd [#allocation3], 0
      %s160 = sshll.u32 [#allocation2], 4
      %s161 = int_to_ptr.vmem [resolvable:$true] %s160
      %s162 = sshll.u32 %s7, 4
      %s163 = int_to_ptr.hbm [resolvable:$true] %s162
      %165 = dma.vmem_to_hbm [thread:$0]  %s161, 128, %s163, [#allocation3]
    $region33: #{policy_forward.1} parent=1 // pred_fallthru
      _
    // Predicated region
    $region34: #{policy_forward.1} parent=1 // pred_check
      _
    $region35: #{policy_forward.1} parent=1 // pred_check_branch
      %167 = sbr.rel (0) target = $region37
    $region36: #{policy_forward.1} parent=1 // pred_region
      %169 = dma.done [#allocation3], 128
    $region37: #{policy_forward.1} parent=1 // pred_fallthru
      _
    %170 = vsyncpa [#allocation3], 1

</llo_original>
